<compile_context>
chip_gen: v7x
topology: tpu7x:2x2x1
jax: 0.10.0
libtpu: 0.0.40
codegen_flags: <defaults>
</compile_context>

<pallas_src>
import jax
import jax.numpy as jnp
from jax import lax
from jax.experimental import pallas as pl
from jax.experimental.pallas import tpu as pltpu


def _round_up(n, m):
    return ((n + m - 1) // m) * m


def _aggregator_kernel(x_ref, w1_ref, b1_ref, w2_ref, b2_ref, o_ref):
    # x_ref:  (TB, D)   tile of input rows (last block may overhang B; rows are
    #                   independent so overhang output columns are garbage and get
    #                   sliced off in the wrapper — do not add cross-row reductions
    #                   here without re-adding masking)
    # w1_ref: (D, H)    first linear weight (transposed vs torch), VMEM-resident
    # b1_ref: (1, H)    first bias
    # w2_ref: (O, H)    second linear weight (torch layout), VMEM-resident
    # b2_ref: (O, 1)    second bias
    # o_ref:  (O, TB)   lane-dense output tile (batch along lanes)
    x = x_ref[...]
    # Default precision => single-pass bf16 MXU (no 3-pass f32 emulation); f32 accum.
    h = jnp.dot(x, w1_ref[...], preferred_element_type=jnp.float32) + b1_ref[...]
    h = jnp.maximum(h, 0.0)  # ReLU on the VPU
    # out_t[o, b] = sum_h w2[o, h] * h[b, h]  -> (O, TB), lane-dense along batch.
    out_t = lax.dot_general(
        w2_ref[...], h,
        dimension_numbers=(((1,), (1,)), ((), ())),
        preferred_element_type=jnp.float32,
    )
    o_ref[...] = (out_t + b2_ref[...]).astype(o_ref.dtype)


def _choose_tile(B, D, H, O, x_itemsize):
    """VMEM-budget-aware batch tile + explicit scoped-VMEM limit (generation-aware)."""
    try:
        vmem_cap = int(pltpu.get_tpu_info().vmem_capacity_bytes)  # per-TensorCore
    except Exception:
        vmem_cap = 64 << 20  # conservative fallback == v7x per-TC VMEM

    # Streaming-data budget: ~1/3 of per-TC VMEM, capped at 48 MiB
    # (v7x: ~21 MiB, v5e/v6e: ~42 MiB).
    budget = min(vmem_cap // 3, 48 << 20)

    d_pad = _round_up(D, 128)   # x lane padding in VMEM
    h_pad = _round_up(H, 128)   # hidden-activation lane padding
    o_sub = _round_up(O, 8)     # output sublane padding

    # Grid-invariant VMEM: weights + biases (constant index_maps, single-buffered).
    weight_bytes = (D * h_pad + o_sub * h_pad + h_pad + o_sub * 128) * 4

    # Per-batch-row VMEM cost of one grid step:
    #   double-buffered x stream + f32 hidden temp + double-buffered (O, tile) output.
    per_row = 2 * d_pad * x_itemsize + h_pad * 4 + 2 * o_sub * 4

    avail = max(budget - weight_bytes, 4 << 20)
    x_buf_target = min(8 << 20, budget // 4)       # cap the per-buffer x DMA size
    tile = min(avail // per_row, x_buf_target // (d_pad * x_itemsize))
    tile = max((tile // 128) * 128, 128)

    # Never bigger than the (lane-rounded) batch ...
    tile = min(tile, _round_up(B, 128))
    # ... and keep >= 2 grid steps for mid/large batches so both v7x TensorCores
    # get work through the "parallel" batch axis.
    if B >= 256:
        tile = min(tile, _round_up(pl.cdiv(B, 2), 128))
    tile = max(tile, 128)

    used = weight_bytes + tile * per_row
    vmem_limit = min(max(used + used // 4 + (4 << 20), 32 << 20), vmem_cap - (4 << 20))
    return tile, int(vmem_limit)


def aggregator_forward(x, w1, b1, w2, b2, *, max_batch_tile=None):
    """x: (B, D). w1: (D, H), b1: (1, H), w2: (O, H), b2: (O, 1). Returns (B, O) f32."""
    B, D = x.shape
    H = w1.shape[1]
    O = w2.shape[0]

    tile, vmem_limit = _choose_tile(B, D, H, O, x.dtype.itemsize)
    if max_batch_tile is not None:
        tile = min(tile, max((int(max_batch_tile) // 128) * 128, 128))

    grid_n = pl.cdiv(B, tile)
    padded_cols = grid_n * tile  # out_shape padded so every store is an unmasked vst

    weight_bytes = (w1.size * w1.dtype.itemsize + w2.size * w2.dtype.itemsize
                    + b1.size * b1.dtype.itemsize + b2.size * b2.dtype.itemsize)
    cost = pl.CostEstimate(
        flops=int(2 * B * (D * H + H * O)),
        transcendentals=0,
        bytes_accessed=int(B * D * x.dtype.itemsize + B * O * 4 + weight_bytes),
    )

    out_t = pl.pallas_call(
        _aggregator_kernel,
        out_shape=jax.ShapeDtypeStruct((O, padded_cols), jnp.float32),
        grid_spec=pltpu.PrefetchScalarGridSpec(
            num_scalar_prefetch=0,
            grid=(grid_n,),
            in_specs=[
                pl.BlockSpec((tile, D), lambda i: (i, 0)),  # x tile: only per-step DMA
                pl.BlockSpec((D, H), lambda i: (0, 0)),     # w1 (VMEM-resident)
                pl.BlockSpec((1, H), lambda i: (0, 0)),     # b1 (VMEM-resident)
                pl.BlockSpec((O, H), lambda i: (0, 0)),     # w2 (VMEM-resident)
                pl.BlockSpec((O, 1), lambda i: (0, 0)),     # b2 (VMEM-resident)
            ],
            out_specs=pl.BlockSpec((O, tile), lambda i: (0, i)),  # lane-dense output
        ),
        compiler_params=pltpu.CompilerParams(
            dimension_semantics=("parallel",),  # shard batch tiles across TCs (v7x)
            vmem_limit_bytes=vmem_limit,
        ),
        cost_estimate=cost,
    )(x, w1, b1, w2, b2)

    # Back to torch-style (B, O).  For O == 1 this transpose is a free reshape; for
    # large O, consumers should prefer the (O, B) slab directly to save an HBM pass.
    return out_t[:, :B].T


def init_aggregator_params(key, input_dim, output_dim=1, hidden=64):
    """Deterministic init mimicking torch.nn.Linear default (uniform +/- 1/sqrt(fan_in)).
    w1 stored as [in, hidden] (transposed vs torch); w2 stored as [out, hidden]."""
    k1, k2, k3, k4 = jax.random.split(key, 4)
    bound1 = 1.0 / jnp.sqrt(jnp.float32(input_dim))
    bound2 = 1.0 / jnp.sqrt(jnp.float32(hidden))
    w1 = jax.random.uniform(k1, (input_dim, hidden), jnp.float32, -bound1, bound1)
    b1 = jax.random.uniform(k2, (1, hidden), jnp.float32, -bound1, bound1)
    w2 = jax.random.uniform(k3, (output_dim, hidden), jnp.float32, -bound2, bound2)
    b2 = jax.random.uniform(k4, (output_dim, 1), jnp.float32, -bound2, bound2)
    return w1, b1, w2, b2


if __name__ == "__main__":
    key = jax.random.PRNGKey(0)
    k_x, k_p, k_x2 = jax.random.split(key, 3)

    input_dim, output_dim = 32, 1
    w1, b1, w2, b2 = init_aggregator_params(k_p, input_dim, output_dim)

    def ref_fn(xx):  # pure-JAX reference (same math as the PyTorch module)
        return jnp.maximum(xx @ w1 + b1, 0.0) @ w2.T + b2.reshape(1, -1)

    # 1) Small batch, not a multiple of 8/128: single ragged tile, no padding copy.
    x_small = jax.random.normal(k_x, (10, input_dim), jnp.float32)
    out_small = jax.block_until_ready(aggregator_forward(x_small, w1, b1, w2, b2))
    assert out_small.shape == (10, output_dim)
    assert jnp.allclose(out_small, ref_fn(x_small), atol=1e-4, rtol=1e-4)

    # 2) Larger batch, auto tile: >= 2 grid steps (v7x megacore) + ragged last block.
    x_big = jax.random.normal(k_x2, (1000, input_dim), jnp.float32)
    out_big = jax.block_until_ready(aggregator_forward(x_big, w1, b1, w2, b2))
    assert out_big.shape == (1000, output_dim)
    assert jnp.allclose(out_big, ref_fn(x_big), atol=1e-4, rtol=1e-4)

    # 3) Same batch with the tile forced to 128: exercises an 8-step grid + ragged edge.
    out_forced = jax.block_until_ready(
        aggregator_forward(x_big, w1, b1, w2, b2, max_batch_tile=128))
    assert jnp.allclose(out_forced, ref_fn(x_big), atol=1e-4, rtol=1e-4)

    print("KERNEL_OK")
</pallas_src>

<mosaic_0001>
module attributes {stable_mosaic.version = 11 : i64} {
  func.func @_aggregator_kernel(%arg0: i32, %arg1: memref<128x32xf32, #tpu.memory_space<vmem>>, %arg2: memref<32x64xf32, #tpu.memory_space<vmem>>, %arg3: memref<1x64xf32, #tpu.memory_space<vmem>>, %arg4: memref<1x64xf32, #tpu.memory_space<vmem>>, %arg5: memref<1x1xf32, #tpu.memory_space<vmem>>, %arg6: memref<1x128xf32, #tpu.memory_space<vmem>>) attributes {dimension_semantics = [#tpu.dimension_semantics<parallel>], iteration_bounds = array<i64: 1>, scalar_prefetch = 0 : i64, scratch_operands = 0 : i64, tpu.core_type = #tpu.core_type<tc>, window_params = [{transform_indices = @transform_0, window_bounds = array<i64: 128, 32>}, {pipeline_mode = #tpu.pipeline_mode<synchronous>, transform_indices = @transform_1, window_bounds = array<i64: 32, 64>}, {pipeline_mode = #tpu.pipeline_mode<synchronous>, transform_indices = @transform_2, window_bounds = array<i64: 1, 64>}, {pipeline_mode = #tpu.pipeline_mode<synchronous>, transform_indices = @transform_3, window_bounds = array<i64: 1, 64>}, {pipeline_mode = #tpu.pipeline_mode<synchronous>, transform_indices = @transform_4, window_bounds = array<i64: 1, 1>}, {transform_indices = @transform_5, window_bounds = array<i64: 1, 128>}]} {
    %c0 = arith.constant 0 : index
    %c0_0 = arith.constant 0 : index
    %0 = vector.load %arg1[%c0, %c0_0] : memref<128x32xf32, #tpu.memory_space<vmem>>, vector<128x32xf32>
    %c0_1 = arith.constant 0 : index
    %c0_2 = arith.constant 0 : index
    %1 = vector.load %arg2[%c0_1, %c0_2] : memref<32x64xf32, #tpu.memory_space<vmem>>, vector<32x64xf32>
    %cst = arith.constant dense<0.000000e+00> : vector<128x64xf32>
    %2 = tpu.matmul %0, %1, %cst {dimension_numbers = #tpu.dot_dimension_numbers<[1], [0], [0], [1], [0, 0, 1, 1], [], []>} : vector<128x32xf32>, vector<32x64xf32>, vector<128x64xf32> -> vector<128x64xf32>
    %c0_3 = arith.constant 0 : index
    %c0_4 = arith.constant 0 : index
    %3 = vector.load %arg3[%c0_3, %c0_4] : memref<1x64xf32, #tpu.memory_space<vmem>>, vector<1x64xf32>
    %4 = vector.broadcast %3 : vector<1x64xf32> to vector<128x64xf32>
    %5 = arith.addf %2, %4 : vector<128x64xf32>
    %cst_5 = arith.constant 0.000000e+00 : f32
    %6 = vector.broadcast %cst_5 : f32 to vector<128x64xf32>
    %7 = arith.maximumf %5, %6 : vector<128x64xf32>
    %c0_6 = arith.constant 0 : index
    %c0_7 = arith.constant 0 : index
    %8 = vector.load %arg4[%c0_6, %c0_7] : memref<1x64xf32, #tpu.memory_space<vmem>>, vector<1x64xf32>
    %cst_8 = arith.constant dense<0.000000e+00> : vector<1x128xf32>
    %9 = tpu.matmul %8, %7, %cst_8 {dimension_numbers = #tpu.dot_dimension_numbers<[1], [1], [0], [0], [0, 0, 1, 0], [], []>} : vector<1x64xf32>, vector<128x64xf32>, vector<1x128xf32> -> vector<1x128xf32>
    %c0_9 = arith.constant 0 : index
    %c0_10 = arith.constant 0 : index
    %10 = vector.load %arg5[%c0_9, %c0_10] : memref<1x1xf32, #tpu.memory_space<vmem>>, vector<1x1xf32>
    %11 = vector.broadcast %10 : vector<1x1xf32> to vector<1x128xf32>
    %12 = arith.addf %9, %11 : vector<1x128xf32>
    %c0_11 = arith.constant 0 : index
    %c0_12 = arith.constant 0 : index
    %13 = vector.load %arg6[%c0_11, %c0_12] : memref<1x128xf32, #tpu.memory_space<vmem>>, vector<1x128xf32>
    tpu.vector_store %arg6[%c0_11, %c0_12], %12 {strides = array<i32>} : memref<1x128xf32, #tpu.memory_space<vmem>>, vector<1x128xf32>,
    return
  }
  func.func @transform_0(%arg0: i32) -> (i32, i32) {
    %c0_i32 = arith.constant 0 : i32
    %c0_i32_0 = arith.constant 0 : i32
    return %arg0, %c0_i32 : i32, i32
  }
  func.func @transform_1(%arg0: i32) -> (i32, i32) {
    %c0_i32 = arith.constant 0 : i32
    %c0_i32_0 = arith.constant 0 : i32
    %c0_i32_1 = arith.constant 0 : i32
    return %c0_i32, %c0_i32_0 : i32, i32
  }
  func.func @transform_2(%arg0: i32) -> (i32, i32) {
    %c0_i32 = arith.constant 0 : i32
    %c0_i32_0 = arith.constant 0 : i32
    %c0_i32_1 = arith.constant 0 : i32
    return %c0_i32, %c0_i32_0 : i32, i32
  }
  func.func @transform_3(%arg0: i32) -> (i32, i32) {
    %c0_i32 = arith.constant 0 : i32
    %c0_i32_0 = arith.constant 0 : i32
    %c0_i32_1 = arith.constant 0 : i32
    return %c0_i32, %c0_i32_0 : i32, i32
  }
  func.func @transform_4(%arg0: i32) -> (i32, i32) {
    %c0_i32 = arith.constant 0 : i32
    %c0_i32_0 = arith.constant 0 : i32
    %c0_i32_1 = arith.constant 0 : i32
    return %c0_i32, %c0_i32_0 : i32, i32
  }
  func.func @transform_5(%arg0: i32) -> (i32, i32) {
    %c0_i32 = arith.constant 0 : i32
    %c0_i32_0 = arith.constant 0 : i32
    return %c0_i32, %arg0 : i32, i32
  }
}

</mosaic_0001>

<llo_original>
// kernel: tpu_custom_call.1
$region0: #{tpu_custom_call.1}
  #allocation0 [shape = 'u32[]', space=smem, size = 0x4, offset = 0x4, fixed_abs, tag = 'smem constant byte address 0x4 - core index']
  #allocation1 [shape = 'u32[144,128]{1,0:T(1,128)}', space=vmem, size = 0x12000, scoped, tag = 'internal scratch']
  #allocation2 [shape = 'f32[1,1]{1,0:T(1,128)S(1)}', space=vmem, size = 0x200, scoped, tag = 'scoped memory for tpu_custom_call.1']
  %s0 = inlined_call_operand.hbm [shape: f32[10,32], index: 0, kind: input, shape index: {}]
  %s1 = inlined_call_operand.hbm [shape: f32[32,64], index: 1, kind: input, shape index: {}]
  %s2 = inlined_call_operand.vmem [shape: f32[1,64], index: 2, kind: input, shape index: {}]
  %s3 = inlined_call_operand.vmem [shape: f32[1,64], index: 3, kind: input, shape index: {}]
  %s4 = inlined_call_operand.<no memory space> [shape: f32[1,1], index: 4, kind: input, shape index: {}]
  %s5 = inlined_call_operand.hbm [shape: f32[1,128], index: 5, kind: output, shape index: {}]
  %s6 = sld [smem:[#allocation0]]
  $region38: #{tpu_custom_call.1} parent=0
    _
  %s8 = ssub.s32 1, %s6
  %s9 = scalar_select 0, %s8, %s6
  %v10 = vstv %s4
  %11 = vst [vmem:[#allocation2] sm:$0x1] %v10
  $region1: #{tpu_custom_call.1} parent=0
    #allocation3 [shape = 'u8[65536]{0}', space=vmem, size = 0x10000, scoped, tag = 'input window, operand 0, single buffered']
    #allocation4 [shape = 's32[1]{0}', space=sflag, size = 0x4, scoped, tag = 'scoped memory for tpu_custom_call.1']
    #allocation5 [shape = 's32[1]{0}', space=sflag, size = 0x4, scoped, tag = 'scoped memory for tpu_custom_call.1']
    #allocation6 [shape = 'u8[16384]{0}', space=vmem, size = 0x4000, scoped, tag = 'input window, operand 1, single buffered']
    #allocation7 [shape = 's32[1]{0}', space=sflag, size = 0x4, scoped, tag = 'scoped memory for tpu_custom_call.1']
    #allocation8 [shape = 'u8[512]{0}', space=vmem, size = 0x400, scoped, tag = 'output window, operand 0, single buffered']
    %12 = vsyncpa [#allocation4], 0
    %13 = vsyncpa [#allocation7], 0
    %14 = vsyncpa [#allocation5], 0
    // Predicated region
    $region2: #{tpu_custom_call.1} parent=1 // pred_check
      _
    $region3: #{tpu_custom_call.1} parent=1 // pred_check_branch
      %16 = sbr.rel (0) target = $region5
    $region4: #{tpu_custom_call.1} parent=1 // pred_region
      %s18 = ssub.s32 2048, 256
      %19 = vsyncadd [#allocation4], %s18
      %s20 = sshll.u32 [#allocation3], 4
      %s21 = int_to_ptr.vmem [resolvable:$true] %s20
      %26 = dma.hbm_to_vmem [thread:$0]  %s0, 256, %s21, [#allocation4], 128, 128, 8
    $region5: #{tpu_custom_call.1} parent=1 // pred_fallthru
      _
    // Predicated region
    $region6: #{tpu_custom_call.1} parent=1 // pred_check
      _
    $region7: #{tpu_custom_call.1} parent=1 // pred_check_branch
      %28 = sbr.rel (0) target = $region9
    $region8: #{tpu_custom_call.1} parent=1 // pred_region
      %s30 = ssub.s32 512, 512
      %31 = vsyncadd [#allocation7], %s30
      %s32 = sshll.u32 [#allocation6], 4
      %s33 = int_to_ptr.vmem [resolvable:$true] %s32
      %38 = dma.hbm_to_vmem [thread:$0]  %s1, 512, %s33, [#allocation7], 128, 128, 8
    $region9: #{tpu_custom_call.1} parent=1 // pred_fallthru
      _
    // Predicated region
    $region10: #{tpu_custom_call.1} parent=1 // pred_check
      _
    $region11: #{tpu_custom_call.1} parent=1 // pred_check_branch
      %40 = sbr.rel (0) target = $region13
    $region12: #{tpu_custom_call.1} parent=1 // pred_region
      _
    $region13: #{tpu_custom_call.1} parent=1 // pred_fallthru
      _
    // Predicated region
    $region14: #{tpu_custom_call.1} parent=1 // pred_check
      _
    $region15: #{tpu_custom_call.1} parent=1 // pred_check_branch
      %42 = sbr.rel (0) target = $region17
    $region16: #{tpu_custom_call.1} parent=1 // pred_region
      _
    $region17: #{tpu_custom_call.1} parent=1 // pred_fallthru
      _
    // Predicated region
    $region18: #{tpu_custom_call.1} parent=1 // pred_check
      _
    $region19: #{tpu_custom_call.1} parent=1 // pred_check_branch
      %44 = sbr.rel (0) target = $region21
    $region20: #{tpu_custom_call.1} parent=1 // pred_region
      _
    $region21: #{tpu_custom_call.1} parent=1 // pred_fallthru
      _
    // Predicated region
    $region22: #{tpu_custom_call.1} parent=1 // pred_check
      _
    $region23: #{tpu_custom_call.1} parent=1 // pred_check_branch
      %46 = sbr.rel (0) target = $region25
    $region24: #{tpu_custom_call.1} parent=1 // pred_region
      %47 = dma.done [#allocation4], 2048
    $region25: #{tpu_custom_call.1} parent=1 // pred_fallthru
      _
    // Predicated region
    $region26: #{tpu_custom_call.1} parent=1 // pred_check
      _
    $region27: #{tpu_custom_call.1} parent=1 // pred_check_branch
      %49 = sbr.rel (0) target = $region29
    $region28: #{tpu_custom_call.1} parent=1 // pred_region
      %50 = dma.done [#allocation7], 512
    $region29: #{tpu_custom_call.1} parent=1 // pred_fallthru
      _
    %v51 = vld [vmem:[#allocation3] sm:$0xff]
    %v52 = vld [vmem:[#allocation3 + $0x8] sm:$0xff]
    %v53 = vld [vmem:[#allocation3 + $0x10] sm:$0xff]
    %v54 = vld [vmem:[#allocation3 + $0x18] sm:$0xff]
    %v55 = vld [vmem:[#allocation3 + $0x20] sm:$0xff]
    %v56 = vld [vmem:[#allocation3 + $0x28] sm:$0xff]
    %v57 = vld [vmem:[#allocation3 + $0x30] sm:$0xff]
    %v58 = vld [vmem:[#allocation3 + $0x38] sm:$0xff]
    %v59 = vld [vmem:[#allocation3 + $0x40] sm:$0xff]
    %v60 = vld [vmem:[#allocation3 + $0x48] sm:$0xff]
    %v61 = vld [vmem:[#allocation3 + $0x50] sm:$0xff]
    %v62 = vld [vmem:[#allocation3 + $0x58] sm:$0xff]
    %v63 = vld [vmem:[#allocation3 + $0x60] sm:$0xff]
    %v64 = vld [vmem:[#allocation3 + $0x68] sm:$0xff]
    %v65 = vld [vmem:[#allocation3 + $0x70] sm:$0xff]
    %v66 = vld [vmem:[#allocation3 + $0x78] sm:$0xff]
    %v67 = vld [vmem:[#allocation6] sm:$0xff]
    %v68 = vld [vmem:[#allocation6 + $0x8] sm:$0xff]
    %v69 = vld [vmem:[#allocation6 + $0x10] sm:$0xff]
    %v70 = vld [vmem:[#allocation6 + $0x18] sm:$0xff]
    %v71 = vld [vmem:[%s2] sm:$0x1]
    %v73 = vlaneseq
    %v74 = vshrl.u32 %v73, 7
    %v75 = vsub.s32 0, %v74
    %v76 = vrot.slane %v71, %v75
    %vm78 = vcmask 261120
    %v80 = vsel %vm78, %v51, 0
    %v83 = vsel %vm78, %v52, 0
    %v86 = vsel %vm78, %v53, 0
    %v89 = vsel %vm78, %v54, 0
    %v92 = vsel %vm78, %v55, 0
    %v95 = vsel %vm78, %v56, 0
    %v98 = vsel %vm78, %v57, 0
    %v101 = vsel %vm78, %v58, 0
    %v104 = vsel %vm78, %v59, 0
    %v107 = vsel %vm78, %v60, 0
    %v110 = vsel %vm78, %v61, 0
    %v113 = vsel %vm78, %v62, 0
    %v116 = vsel %vm78, %v63, 0
    %v119 = vsel %vm78, %v64, 0
    %v122 = vsel %vm78, %v65, 0
    %v125 = vsel %vm78, %v66, 0
    %127 = vmatprep.subr.mxu0 0.0
    %128 = vmatpush1.msra.mxu0 %v67
    %129 = vmatprep.subr.mxu0 0.0
    %130 = vmatpush1.msra.mxu0 %v68
    %131 = vmatprep.subr.mxu0 0.0
    %132 = vmatpush1.msra.mxu0 %v69
    %133 = vmatprep.subr.mxu0 0.0
    %134 = vmatpush1.msra.mxu0 %v70
    %135 = vmatprep.subr.mxu0 0.0
    %136 = vmatpush1.msra.mxu0 0.0
    %137 = vmatprep.subr.mxu0 0.0
    %138 = vmatpush1.msra.mxu0 0.0
    %139 = vmatprep.subr.mxu0 0.0
    %140 = vmatpush1.msra.mxu0 0.0
    %141 = vmatprep.subr.mxu0 0.0
    %142 = vmatpush1.msra.mxu0 0.0
    %143 = vmatprep.subr.mxu0 0.0
    %144 = vmatpush1.msra.mxu0 0.0
    %145 = vmatprep.subr.mxu0 0.0
    %146 = vmatpush1.msra.mxu0 0.0
    %147 = vmatprep.subr.mxu0 0.0
    %148 = vmatpush1.msra.mxu0 0.0
    %149 = vmatprep.subr.mxu0 0.0
    %150 = vmatpush1.msra.mxu0 0.0
    %151 = vmatprep.subr.mxu0 0.0
    %152 = vmatpush1.msra.mxu0 0.0
    %153 = vmatprep.subr.mxu0 0.0
    %154 = vmatpush1.msra.mxu0 0.0
    %155 = vmatprep.subr.mxu0 0.0
    %156 = vmatpush1.msra.mxu0 0.0
    %157 = vmatprep.subr.mxu0 0.0
    %158 = vmatpush1.msra.mxu0 0.0
    %159 = vmatprep.subr.mxu0 0.0
    %160 = vmatpush1.msra.mxu0 0.0
    %161 = vmatprep.subr.mxu0 0.0
    %162 = vmatpush1.msra.mxu0 0.0
    %163 = vmatprep.subr.mxu0 0.0
    %164 = vmatpush1.msra.mxu0 0.0
    %165 = vmatprep.subr.mxu0 0.0
    %166 = vmatpush1.msra.mxu0 0.0
    %167 = vmatprep.subr.mxu0 0.0
    %168 = vmatpush1.msra.mxu0 0.0
    %169 = vmatprep.subr.mxu0 0.0
    %170 = vmatpush1.msra.mxu0 0.0
    %171 = vmatprep.subr.mxu0 0.0
    %172 = vmatpush1.msra.mxu0 0.0
    %173 = vmatprep.subr.mxu0 0.0
    %174 = vmatpush1.msra.mxu0 0.0
    %175 = vmatprep.subr.mxu0 0.0
    %176 = vmatpush1.msra.mxu0 0.0
    %177 = vmatprep.subr.mxu0 0.0
    %178 = vmatpush1.msra.mxu0 0.0
    %179 = vmatprep.subr.mxu0 0.0
    %180 = vmatpush1.msra.mxu0 0.0
    %181 = vmatprep.subr.mxu0 0.0
    %182 = vmatpush1.msra.mxu0 0.0
    %183 = vmatprep.subr.mxu0 0.0
    %184 = vmatpush1.msra.mxu0 0.0
    %185 = vmatprep.subr.mxu0 0.0
    %186 = vmatpush1.msra.mxu0 0.0
    %187 = vmatprep.subr.mxu0 0.0
    %188 = vmatpush1.msra.mxu0 0.0
    %189 = vmatprep.subr.mxu0 0.0
    %190 = vmatpush1.msra.mxu0 0.0
    %191 = vmatprep.mubr.f32.mxu0 0.0
    %192 = vmatmul.mubr.f32.gmra.mrb[0].mxu0 %v80
    %v193 = vpop.f32.mrb[0].mxu0
    %v194 = vadd.f32 %v76, %v193
    %v195 = vpop.f32.mrb[0].mxu0
    %196 = vmatprep.mubr.f32.mxu0 0.0
    %197 = vmatmul.mubr.f32.gmra.mrb[0].mxu0 %v83
    %v198 = vpop.f32.mrb[0].mxu0
    %v199 = vadd.f32 %v76, %v198
    %v200 = vpop.f32.mrb[0].mxu0
    %201 = vmatprep.mubr.f32.mxu0 0.0
    %202 = vmatmul.mubr.f32.gmra.mrb[0].mxu0 %v86
    %v203 = vpop.f32.mrb[0].mxu0
    %v204 = vadd.f32 %v76, %v203
    %v205 = vpop.f32.mrb[0].mxu0
    %206 = vmatprep.mubr.f32.mxu0 0.0
    %207 = vmatmul.mubr.f32.gmra.mrb[0].mxu0 %v89
    %v208 = vpop.f32.mrb[0].mxu0
    %v209 = vadd.f32 %v76, %v208
    %v210 = vpop.f32.mrb[0].mxu0
    %211 = vmatprep.mubr.f32.mxu0 0.0
    %212 = vmatmul.mubr.f32.gmra.mrb[0].mxu0 %v92
    %v213 = vpop.f32.mrb[0].mxu0
    %v214 = vadd.f32 %v76, %v213
    %v215 = vpop.f32.mrb[0].mxu0
    %216 = vmatprep.mubr.f32.mxu0 0.0
    %217 = vmatmul.mubr.f32.gmra.mrb[0].mxu0 %v95
    %v218 = vpop.f32.mrb[0].mxu0
    %v219 = vadd.f32 %v76, %v218
    %v220 = vpop.f32.mrb[0].mxu0
    %221 = vmatprep.mubr.f32.mxu0 0.0
    %222 = vmatmul.mubr.f32.gmra.mrb[0].mxu0 %v98
    %v223 = vpop.f32.mrb[0].mxu0
    %v224 = vadd.f32 %v76, %v223
    %v225 = vpop.f32.mrb[0].mxu0
    %226 = vmatprep.mubr.f32.mxu0 0.0
    %227 = vmatmul.mubr.f32.gmra.mrb[0].mxu0 %v101
    %v228 = vpop.f32.mrb[0].mxu0
    %v229 = vadd.f32 %v76, %v228
    %v230 = vpop.f32.mrb[0].mxu0
    %231 = vmatprep.mubr.f32.mxu0 0.0
    %232 = vmatmul.mubr.f32.gmra.mrb[0].mxu0 %v104
    %v233 = vpop.f32.mrb[0].mxu0
    %v234 = vadd.f32 %v76, %v233
    %v235 = vpop.f32.mrb[0].mxu0
    %236 = vmatprep.mubr.f32.mxu0 0.0
    %237 = vmatmul.mubr.f32.gmra.mrb[0].mxu0 %v107
    %v238 = vpop.f32.mrb[0].mxu0
    %v239 = vadd.f32 %v76, %v238
    %v240 = vpop.f32.mrb[0].mxu0
    %241 = vmatprep.mubr.f32.mxu0 0.0
    %242 = vmatmul.mubr.f32.gmra.mrb[0].mxu0 %v110
    %v243 = vpop.f32.mrb[0].mxu0
    %v244 = vadd.f32 %v76, %v243
    %v245 = vpop.f32.mrb[0].mxu0
    %246 = vmatprep.mubr.f32.mxu0 0.0
    %247 = vmatmul.mubr.f32.gmra.mrb[0].mxu0 %v113
    %v248 = vpop.f32.mrb[0].mxu0
    %v249 = vadd.f32 %v76, %v248
    %v250 = vpop.f32.mrb[0].mxu0
    %251 = vmatprep.mubr.f32.mxu0 0.0
    %252 = vmatmul.mubr.f32.gmra.mrb[0].mxu0 %v116
    %v253 = vpop.f32.mrb[0].mxu0
    %v254 = vadd.f32 %v76, %v253
    %v255 = vpop.f32.mrb[0].mxu0
    %256 = vmatprep.mubr.f32.mxu0 0.0
    %257 = vmatmul.mubr.f32.gmra.mrb[0].mxu0 %v119
    %v258 = vpop.f32.mrb[0].mxu0
    %v259 = vadd.f32 %v76, %v258
    %v260 = vpop.f32.mrb[0].mxu0
    %261 = vmatprep.mubr.f32.mxu0 0.0
    %262 = vmatmul.mubr.f32.gmra.mrb[0].mxu0 %v122
    %v263 = vpop.f32.mrb[0].mxu0
    %v264 = vadd.f32 %v76, %v263
    %v265 = vpop.f32.mrb[0].mxu0
    %266 = vmatprep.mubr.f32.mxu0 0.0
    %267 = vmatmul.mubr.f32.gmra.mrb[0].mxu0 %v125
    %v268 = vpop.f32.mrb[0].mxu0
    %v269 = vadd.f32 %v76, %v268
    %v270 = vpop.f32.mrb[0].mxu0
    %271 = vdwg.mxu0
    %v272 = vmax.f32 %v194, 0.0
    %v273 = vmax.f32 %v199, 0.0
    %v274 = vmax.f32 %v204, 0.0
    %v275 = vmax.f32 %v209, 0.0
    %v276 = vmax.f32 %v214, 0.0
    %v277 = vmax.f32 %v219, 0.0
    %v278 = vmax.f32 %v224, 0.0
    %v279 = vmax.f32 %v229, 0.0
    %v280 = vmax.f32 %v234, 0.0
    %v281 = vmax.f32 %v239, 0.0
    %v282 = vmax.f32 %v244, 0.0
    %v283 = vmax.f32 %v249, 0.0
    %v284 = vmax.f32 %v254, 0.0
    %v285 = vmax.f32 %v259, 0.0
    %v286 = vmax.f32 %v264, 0.0
    %v287 = vmax.f32 %v269, 0.0
    %v288 = vld [vmem:[%s3] sm:$0x1]
    %v289 = vld [vmem:[#allocation2] sm:$0x1]
    %291 = vset.pattern.permute.xlu0 0
    %292 = vperm.xlu0 %291, %v289
    %v293 = vpop.permute.xlu0 %292
    %v295 = vlaneseq
    %v296 = vshrl.u32 %v295, 7
    %v297 = vsub.s32 0, %v296
    %v298 = vrot.slane %v293, %v297
    %vm299 = vcmask 523264
    %v301 = vsel %vm299, %v288, 0
    %v304 = vsel %vm299, %v272, 0
    %v307 = vsel %vm299, %v273, 0
    %v310 = vsel %vm299, %v274, 0
    %v313 = vsel %vm299, %v275, 0
    %v316 = vsel %vm299, %v276, 0
    %v319 = vsel %vm299, %v277, 0
    %v322 = vsel %vm299, %v278, 0
    %v325 = vsel %vm299, %v279, 0
    %v328 = vsel %vm299, %v280, 0
    %v331 = vsel %vm299, %v281, 0
    %v334 = vsel %vm299, %v282, 0
    %v337 = vsel %vm299, %v283, 0
    %v340 = vsel %vm299, %v284, 0
    %v343 = vsel %vm299, %v285, 0
    %v346 = vsel %vm299, %v286, 0
    %v349 = vsel %vm299, %v287, 0
    %351 = vmatprep.subr.mxu0 0.0
    %352 = vmatpush1.xpose.msra.mxu0 %v304
    %353 = vmatprep.subr.mxu0 0.0
    %354 = vmatpush1.xpose.msra.mxu0 %v307
    %355 = vmatprep.subr.mxu0 0.0
    %356 = vmatpush1.xpose.msra.mxu0 %v310
    %357 = vmatprep.subr.mxu0 0.0
    %358 = vmatpush1.xpose.msra.mxu0 %v313
    %359 = vmatprep.subr.mxu0 0.0
    %360 = vmatpush1.xpose.msra.mxu0 %v316
    %361 = vmatprep.subr.mxu0 0.0
    %362 = vmatpush1.xpose.msra.mxu0 %v319
    %363 = vmatprep.subr.mxu0 0.0
    %364 = vmatpush1.xpose.msra.mxu0 %v322
    %365 = vmatprep.subr.mxu0 0.0
    %366 = vmatpush1.xpose.msra.mxu0 %v325
    %367 = vmatprep.subr.mxu0 0.0
    %368 = vmatpush1.xpose.msra.mxu0 %v328
    %369 = vmatprep.subr.mxu0 0.0
    %370 = vmatpush1.xpose.msra.mxu0 %v331
    %371 = vmatprep.subr.mxu0 0.0
    %372 = vmatpush1.xpose.msra.mxu0 %v334
    %373 = vmatprep.subr.mxu0 0.0
    %374 = vmatpush1.xpose.msra.mxu0 %v337
    %375 = vmatprep.subr.mxu0 0.0
    %376 = vmatpush1.xpose.msra.mxu0 %v340
    %377 = vmatprep.subr.mxu0 0.0
    %378 = vmatpush1.xpose.msra.mxu0 %v343
    %379 = vmatprep.subr.mxu0 0.0
    %380 = vmatpush1.xpose.msra.mxu0 %v346
    %381 = vmatprep.subr.mxu0 0.0
    %382 = vmatpush1.xpose.msra.mxu0 %v349
    %383 = vmatprep.subr.mxu0 0.0
    %384 = vmatpush1.xpose.msra.mxu0 0.0
    %385 = vmatprep.subr.mxu0 0.0
    %386 = vmatpush1.xpose.msra.mxu0 0.0
    %387 = vmatprep.subr.mxu0 0.0
    %388 = vmatpush1.xpose.msra.mxu0 0.0
    %389 = vmatprep.subr.mxu0 0.0
    %390 = vmatpush1.xpose.msra.mxu0 0.0
    %391 = vmatprep.subr.mxu0 0.0
    %392 = vmatpush1.xpose.msra.mxu0 0.0
    %393 = vmatprep.subr.mxu0 0.0
    %394 = vmatpush1.xpose.msra.mxu0 0.0
    %395 = vmatprep.subr.mxu0 0.0
    %396 = vmatpush1.xpose.msra.mxu0 0.0
    %397 = vmatprep.subr.mxu0 0.0
    %398 = vmatpush1.xpose.msra.mxu0 0.0
    %399 = vmatprep.subr.mxu0 0.0
    %400 = vmatpush1.xpose.msra.mxu0 0.0
    %401 = vmatprep.subr.mxu0 0.0
    %402 = vmatpush1.xpose.msra.mxu0 0.0
    %403 = vmatprep.subr.mxu0 0.0
    %404 = vmatpush1.xpose.msra.mxu0 0.0
    %405 = vmatprep.subr.mxu0 0.0
    %406 = vmatpush1.xpose.msra.mxu0 0.0
    %407 = vmatprep.subr.mxu0 0.0
    %408 = vmatpush1.xpose.msra.mxu0 0.0
    %409 = vmatprep.subr.mxu0 0.0
    %410 = vmatpush1.xpose.msra.mxu0 0.0
    %411 = vmatprep.subr.mxu0 0.0
    %412 = vmatpush1.xpose.msra.mxu0 0.0
    %413 = vmatprep.subr.mxu0 0.0
    %414 = vmatpush1.xpose.msra.mxu0 0.0
    %415 = vmatprep.mubr.f32.mxu0 0.0
    %416 = vmatmul.mubr.f32.gmra.mrb[0].mxu0 %v301
    %v417 = vpop.f32.mrb[0].mxu0
    %v418 = vadd.f32 %v298, %v417
    %v419 = vpop.f32.mrb[0].mxu0
    %420 = vdwg.mxu0
    %421 = vst [vmem:[#allocation8] sm:$0x1] %v418
    // Predicated region
    $region30: #{tpu_custom_call.1} parent=1 // pred_check
      _
    $region31: #{tpu_custom_call.1} parent=1 // pred_check_branch
      %423 = sbr.rel (0) target = $region33
    $region32: #{tpu_custom_call.1} parent=1 // pred_region
      %s425 = ssub.s32 16, 16
      %426 = vsyncadd [#allocation5], %s425
      %s428 = sshll.u32 [#allocation8], 4
      %s429 = int_to_ptr.vmem [resolvable:$true] %s428
      %431 = dma.vmem_to_hbm [thread:$0]  %s429, 16, %s5, [#allocation5]
    $region33: #{tpu_custom_call.1} parent=1 // pred_fallthru
      _
    // Predicated region
    $region34: #{tpu_custom_call.1} parent=1 // pred_check
      _
    $region35: #{tpu_custom_call.1} parent=1 // pred_check_branch
      %433 = sbr.rel (0) target = $region37
    $region36: #{tpu_custom_call.1} parent=1 // pred_region
      %434 = dma.done [#allocation5], 16
    $region37: #{tpu_custom_call.1} parent=1 // pred_fallthru
      _
    %435 = vsyncpa [#allocation4], 1
    %436 = vsyncpa [#allocation7], 1
    %437 = vsyncpa [#allocation5], 1

</llo_original>
